<compile_context>
chip_gen: v6e
topology: v6e:2x2x1
jax: 0.10.0
libtpu: 0.0.40
codegen_flags: <defaults>
</compile_context>

<pallas_src>
import math

import jax
import jax.numpy as jnp
from jax.experimental import pallas as pl
from jax.experimental.pallas import tpu as pltpu


# ----------------------------------------------------------------------------
# Pallas kernel:
#   x   = onehot(t) @ table                     (MXU gather)
#   h   = GELU_erf(x @ W1 + b1)
#   out = h @ W2 + b2
# ----------------------------------------------------------------------------
def _time_embedding_kernel(t_ref, table_ref, params_ref, o_ref):
    B, dim = o_ref.shape
    T, d_model = table_ref.shape

    # --- Embedding lookup as a one-hot matmul (no XLU relayout, no concat) ---
    t_col = jnp.clip(t_ref[...], 0, T - 1)                      # (B, 1) int32
    col = jax.lax.broadcasted_iota(jnp.int32, (B, T), 1)         # (B, T)
    onehot = (col == t_col).astype(jnp.float32)                  # (B, T)
    x = jnp.dot(onehot, table_ref[...],
                preferred_element_type=jnp.float32)              # (B, d_model)

    # --- Static (zero-cost) slices of the packed parameter buffer -----------
    w1 = params_ref[0:d_model, :]                                # (d_model, dim)
    w2 = params_ref[d_model:d_model + dim, :]                    # (dim, dim)
    b1 = params_ref[d_model + dim:d_model + dim + 1, :]          # (1, dim)
    b2 = params_ref[d_model + dim + 1:d_model + dim + 2, :]      # (1, dim)

    # --- MLP: Linear -> exact-erf GELU -> Linear (fp32 throughout) ----------
    h = jnp.dot(x, w1, preferred_element_type=jnp.float32) + b1
    h = 0.5 * h * (1.0 + jax.lax.erf(h * (1.0 / math.sqrt(2.0))))
    o = jnp.dot(h, w2, preferred_element_type=jnp.float32) + b2
    o_ref[...] = o.astype(o_ref.dtype)


def pack_params(w1, b1, w2, b2):
    """Pack W1/W2/b1/b2 into one buffer ONCE (module-init time) so the kernel
    needs a single parameter DMA per call."""
    d_model, dim = w1.shape
    assert w2.shape == (dim, dim) and b1.shape == (dim,) and b2.shape == (dim,)
    return jnp.concatenate(
        [w1, w2, b1.reshape(1, dim), b2.reshape(1, dim)], axis=0
    )  # (d_model + dim + 2, dim) fp32


def time_embedding_pallas(t, table, packed_params):
    """t: (B,) int -> (B, dim) fp32. Whole forward fused in one kernel call."""
    B = t.shape[0]
    T, d_model = table.shape
    dim = packed_params.shape[1]

    t_col = t.astype(jnp.int32).reshape(B, 1)

    flops = 2 * B * (T * d_model + d_model * dim + dim * dim) + 6 * B * dim
    bytes_accessed = 4 * (B + T * d_model + packed_params.size + B * dim)

    vmem_spec = pl.BlockSpec(memory_space=pltpu.MemorySpace.VMEM)
    return pl.pallas_call(
        _time_embedding_kernel,
        out_shape=jax.ShapeDtypeStruct((B, dim), jnp.float32),
        # No grid: single invocation, whole arrays resident, no double-buffering.
        in_specs=[
            vmem_spec,  # t as (B, 1) int32 column
            vmem_spec,  # sinusoidal table (T, d_model)
            vmem_spec,  # packed [W1; W2; b1; b2]
        ],
        out_specs=vmem_spec,
        cost_estimate=pl.CostEstimate(
            flops=flops,
            transcendentals=B * dim,  # erf per hidden activation
            bytes_accessed=bytes_accessed,
        ),
    )(t_col, table, packed_params)


# ----------------------------------------------------------------------------
# Module construction (mirrors PyTorch __init__) + forward
# ----------------------------------------------------------------------------
def make_sinusoidal_table(T, d_model):
    # Mirrors the PyTorch __init__ exactly (interleaved sin/cos).
    assert d_model % 2 == 0
    emb = jnp.arange(0, d_model, 2, dtype=jnp.float32) / d_model * math.log(10000.0)
    emb = jnp.exp(-emb)                                      # (d_model//2,)
    pos = jnp.arange(T, dtype=jnp.float32)                   # (T,)
    emb = pos[:, None] * emb[None, :]                        # (T, d_model//2)
    emb = jnp.stack([jnp.sin(emb), jnp.cos(emb)], axis=-1)   # (T, d_model//2, 2)
    return emb.reshape(T, d_model)                           # (T, d_model)


def init_params(key, d_model, dim):
    # Deterministic, PyTorch-Linear-style uniform init.
    k1, k2, k3, k4 = jax.random.split(key, 4)
    lim1 = 1.0 / math.sqrt(d_model)
    lim2 = 1.0 / math.sqrt(dim)
    w1 = jax.random.uniform(k1, (d_model, dim), jnp.float32, -lim1, lim1)
    b1 = jax.random.uniform(k2, (dim,), jnp.float32, -lim1, lim1)
    w2 = jax.random.uniform(k3, (dim, dim), jnp.float32, -lim2, lim2)
    b2 = jax.random.uniform(k4, (dim,), jnp.float32, -lim2, lim2)
    return w1, b1, w2, b2


def time_embedding_forward(t, table, packed_params):
    # Everything (gather + MLP) runs inside one Pallas kernel invocation.
    return time_embedding_pallas(t, table, packed_params)


# ----------------------------------------------------------------------------
if __name__ == "__main__":
    T, d_model, dim = 16, 32, 64
    B = 8

    table = make_sinusoidal_table(T, d_model)
    w1, b1, w2, b2 = init_params(jax.random.PRNGKey(0), d_model, dim)
    packed = pack_params(w1, b1, w2, b2)   # done once, at "module init"

    # Deterministic timestep indices.
    t = jax.random.randint(jax.random.PRNGKey(1), (B,), 0, T, dtype=jnp.int32)

    out = time_embedding_forward(t, table, packed)
    out = jax.block_until_ready(out)

    # Pure-JAX reference check (embedding lookup + exact-erf GELU MLP).
    x = table[t]
    h = x @ w1 + b1
    h = 0.5 * h * (1.0 + jax.lax.erf(h / math.sqrt(2.0)))
    ref = h @ w2 + b2
    assert out.shape == (B, dim)
    assert jnp.allclose(out, ref, atol=1e-5, rtol=1e-5), "mismatch vs reference"

    print("KERNEL_OK")
</pallas_src>

<mosaic_0001>
module attributes {stable_mosaic.version = 11 : i64} {
  func.func @_time_embedding_kernel(%arg0: memref<8x1xi32, #tpu.memory_space<vmem>>, %arg1: memref<16x32xf32, #tpu.memory_space<vmem>>, %arg2: memref<98x64xf32, #tpu.memory_space<vmem>>, %arg3: memref<8x64xf32, #tpu.memory_space<vmem>>) attributes {dimension_semantics = [], scalar_prefetch = 0 : i64, scratch_operands = 0 : i64, tpu.core_type = #tpu.core_type<tc>} {
    %c0 = arith.constant 0 : index
    %c0_0 = arith.constant 0 : index
    %0 = vector.load %arg0[%c0, %c0_0] : memref<8x1xi32, #tpu.memory_space<vmem>>, vector<8x1xi32>
    %c0_i32 = arith.constant 0 : i32
    %c15_i32 = arith.constant 15 : i32
    %1 = vector.broadcast %c0_i32 : i32 to vector<8x1xi32>
    %2 = arith.maxsi %1, %0 : vector<8x1xi32>
    %3 = vector.broadcast %c15_i32 : i32 to vector<8x1xi32>
    %4 = arith.minsi %3, %2 : vector<8x1xi32>
    %5 = tpu.iota {dimensions = array<i32: 1>} : vector<8x16xi32>
    %6 = vector.broadcast %4 : vector<8x1xi32> to vector<8x16xi32>
    %7 = arith.cmpi eq, %5, %6 : vector<8x16xi32>
    %8 = arith.extui %7 : vector<8x16xi1> to vector<8x16xi32>
    %9 = arith.sitofp %8 : vector<8x16xi32> to vector<8x16xf32>
    %c0_1 = arith.constant 0 : index
    %c0_2 = arith.constant 0 : index
    %10 = vector.load %arg1[%c0_1, %c0_2] : memref<16x32xf32, #tpu.memory_space<vmem>>, vector<16x32xf32>
    %cst = arith.constant dense<0.000000e+00> : vector<8x32xf32>
    %11 = tpu.matmul %9, %10, %cst {dimension_numbers = #tpu.dot_dimension_numbers<[1], [0], [0], [1], [0, 0, 1, 1], [], []>} : vector<8x16xf32>, vector<16x32xf32>, vector<8x32xf32> -> vector<8x32xf32>
    %c0_3 = arith.constant 0 : index
    %c0_4 = arith.constant 0 : index
    %12 = vector.load %arg2[%c0_3, %c0_4] : memref<98x64xf32, #tpu.memory_space<vmem>>, vector<32x64xf32>
    %c32 = arith.constant 32 : index
    %c0_5 = arith.constant 0 : index
    %13 = vector.load %arg2[%c32, %c0_5] : memref<98x64xf32, #tpu.memory_space<vmem>>, vector<64x64xf32>
    %c96 = arith.constant 96 : index
    %c0_6 = arith.constant 0 : index
    %14 = vector.load %arg2[%c96, %c0_6] : memref<98x64xf32, #tpu.memory_space<vmem>>, vector<1x64xf32>
    %c97 = arith.constant 97 : index
    %c0_7 = arith.constant 0 : index
    %15 = vector.load %arg2[%c97, %c0_7] : memref<98x64xf32, #tpu.memory_space<vmem>>, vector<1x64xf32>
    %cst_8 = arith.constant dense<0.000000e+00> : vector<8x64xf32>
    %16 = tpu.matmul %11, %12, %cst_8 {dimension_numbers = #tpu.dot_dimension_numbers<[1], [0], [0], [1], [0, 0, 1, 1], [], []>} : vector<8x32xf32>, vector<32x64xf32>, vector<8x64xf32> -> vector<8x64xf32>
    %17 = vector.broadcast %14 : vector<1x64xf32> to vector<8x64xf32>
    %18 = arith.addf %16, %17 : vector<8x64xf32>
    %cst_9 = arith.constant 5.000000e-01 : f32
    %19 = vector.broadcast %cst_9 : f32 to vector<8x64xf32>
    %20 = arith.mulf %19, %18 : vector<8x64xf32>
    %cst_10 = arith.constant 0.707106769 : f32
    %21 = vector.broadcast %cst_10 : f32 to vector<8x64xf32>
    %22 = arith.mulf %18, %21 : vector<8x64xf32>
    %23 = math.erf %22 : vector<8x64xf32>
    %cst_11 = arith.constant 1.000000e+00 : f32
    %24 = vector.broadcast %cst_11 : f32 to vector<8x64xf32>
    %25 = arith.addf %24, %23 : vector<8x64xf32>
    %26 = arith.mulf %20, %25 : vector<8x64xf32>
    %cst_12 = arith.constant dense<0.000000e+00> : vector<8x64xf32>
    %27 = tpu.matmul %26, %13, %cst_12 {dimension_numbers = #tpu.dot_dimension_numbers<[1], [0], [0], [1], [0, 0, 1, 1], [], []>} : vector<8x64xf32>, vector<64x64xf32>, vector<8x64xf32> -> vector<8x64xf32>
    %28 = vector.broadcast %15 : vector<1x64xf32> to vector<8x64xf32>
    %29 = arith.addf %27, %28 : vector<8x64xf32>
    %c0_13 = arith.constant 0 : index
    %c0_14 = arith.constant 0 : index
    %30 = vector.load %arg3[%c0_13, %c0_14] : memref<8x64xf32, #tpu.memory_space<vmem>>, vector<8x64xf32>
    tpu.vector_store %arg3[%c0_13, %c0_14], %29 {strides = array<i32>} : memref<8x64xf32, #tpu.memory_space<vmem>>, vector<8x64xf32>,
    return
  }
}

</mosaic_0001>

<llo_original>
// kernel: tpu_custom_call.1
$region0: #{tpu_custom_call.1}
  #allocation0 [shape = 'u32[]', space=smem, size = 0x4, offset = 0x4, fixed_abs, tag = 'smem constant byte address 0x4 - core index']
  #allocation1 [shape = 'u32[144,128]{1,0:T(1,128)}', space=vmem, size = 0x12000, scoped, tag = 'internal scratch']
  %s0 = inlined_call_operand.vmem [shape: s32[8,1], index: 0, kind: input, shape index: {}]
  %s1 = inlined_call_operand.vmem [shape: f32[16,32], index: 1, kind: input, shape index: {}]
  %s2 = inlined_call_operand.vmem [shape: f32[98,64], index: 2, kind: input, shape index: {}]
  %s3 = inlined_call_operand.hbm [shape: f32[8,64], index: 3, kind: output, shape index: {}]
  %s4 = sld [smem:[#allocation0]]
  $region22: #{tpu_custom_call.1} parent=0
    _
  %s6 = ssub.s32 1, %s4
  %s7 = scalar_select 0, %s6, %s4
  $region1: #{tpu_custom_call.1} parent=0
    #allocation2 [shape = 'u8[4096]{0}', space=vmem, size = 0x1000, scoped, tag = 'output window, operand 0, single buffered']
    #allocation3 [shape = 's32[1]{0}', space=sflag, size = 0x4, scoped, tag = 'scoped memory for tpu_custom_call.1']
    %8 = vsyncpa [#allocation3], 0
    // Predicated region
    $region2: #{tpu_custom_call.1} parent=1 // pred_check
      _
    $region3: #{tpu_custom_call.1} parent=1 // pred_check_branch
      %10 = sbr.rel (0) target = $region5
    $region4: #{tpu_custom_call.1} parent=1 // pred_region
      _
    $region5: #{tpu_custom_call.1} parent=1 // pred_fallthru
      _
    // Predicated region
    $region6: #{tpu_custom_call.1} parent=1 // pred_check
      _
    $region7: #{tpu_custom_call.1} parent=1 // pred_check_branch
      %12 = sbr.rel (0) target = $region9
    $region8: #{tpu_custom_call.1} parent=1 // pred_region
      _
    $region9: #{tpu_custom_call.1} parent=1 // pred_fallthru
      _
    // Predicated region
    $region10: #{tpu_custom_call.1} parent=1 // pred_check
      _
    $region11: #{tpu_custom_call.1} parent=1 // pred_check_branch
      %14 = sbr.rel (0) target = $region13
    $region12: #{tpu_custom_call.1} parent=1 // pred_region
      _
    $region13: #{tpu_custom_call.1} parent=1 // pred_fallthru
      _
    %v15 = vld [vmem:[%s0] sm:$0xff]
    %vm16 = vcmp.gt.s32.totalorder %v15, 0
    %v17 = vsel %vm16, %v15, 0
    %vm18 = vcmp.lt.s32.totalorder %v17, 15
    %v19 = vsel %vm18, %v17, 15
    %v20 = vlaneseq
    %v21 = vand.u32 %v20, 127
    %22 = vset.pattern.permute.xlu0 0
    %23 = vperm.xlu0 %22, %v19
    %v24 = vpop.permute.xlu0 %23
    %vm25 = vcmp.eq.s32.totalorder %v21, %v24
    %v26 = vsel %vm25, 1, 0
    %v27 = vcvt.s32.f32 %v26
    %v28 = vld [vmem:[%s1] sm:$0xff]
    %v29 = vld [vmem:[%s1 + $0x8] sm:$0xff]
    %vm30 = vcmask 130048
    %v32 = vsel %vm30, %v27, 0
    %34 = vmatprep.subr.mxu0 0.0
    %35 = vmatpush1.msra.mxu0 0.0
    %36 = vmatprep.subr.mxu0 0.0
    %37 = vmatpush1.msra.mxu0 0.0
    %38 = vmatprep.subr.mxu0 0.0
    %39 = vmatpush1.msra.mxu0 0.0
    %40 = vmatprep.subr.mxu0 0.0
    %41 = vmatpush1.msra.mxu0 0.0
    %42 = vmatprep.subr.mxu0 0.0
    %43 = vmatpush1.msra.mxu0 0.0
    %44 = vmatprep.subr.mxu0 0.0
    %45 = vmatpush1.msra.mxu0 0.0
    %46 = vmatprep.subr.mxu0 0.0
    %47 = vmatpush1.msra.mxu0 0.0
    %48 = vmatprep.subr.mxu0 0.0
    %49 = vmatpush1.msra.mxu0 0.0
    %50 = vmatprep.subr.mxu0 0.0
    %51 = vmatpush1.msra.mxu0 0.0
    %52 = vmatprep.subr.mxu0 0.0
    %53 = vmatpush1.msra.mxu0 0.0
    %54 = vmatprep.subr.mxu0 0.0
    %55 = vmatpush1.msra.mxu0 0.0
    %56 = vmatprep.subr.mxu0 0.0
    %57 = vmatpush1.msra.mxu0 0.0
    %58 = vmatprep.subr.mxu0 0.0
    %59 = vmatpush1.msra.mxu0 0.0
    %60 = vmatprep.subr.mxu0 0.0
    %61 = vmatpush1.msra.mxu0 0.0
    %62 = vmatprep.subr.mxu0 0.0
    %63 = vmatpush1.msra.mxu0 %v29
    %64 = vmatprep.subr.mxu0 0.0
    %65 = vmatpush1.msra.mxu0 %v28
    %66 = vmatprep.subr.mxu0 0.0
    %67 = vmatpush2.msra.mxu0 0.0
    %68 = vmatprep.subr.mxu0 0.0
    %69 = vmatpush2.msra.mxu0 0.0
    %70 = vmatprep.subr.mxu0 0.0
    %71 = vmatpush2.msra.mxu0 0.0
    %72 = vmatprep.subr.mxu0 0.0
    %73 = vmatpush2.msra.mxu0 0.0
    %74 = vmatprep.subr.mxu0 0.0
    %75 = vmatpush2.msra.mxu0 0.0
    %76 = vmatprep.subr.mxu0 0.0
    %77 = vmatpush2.msra.mxu0 0.0
    %78 = vmatprep.subr.mxu0 0.0
    %79 = vmatpush2.msra.mxu0 0.0
    %80 = vmatprep.subr.mxu0 0.0
    %81 = vmatpush2.msra.mxu0 0.0
    %82 = vmatprep.subr.mxu0 0.0
    %83 = vmatpush2.msra.mxu0 0.0
    %84 = vmatprep.subr.mxu0 0.0
    %85 = vmatpush2.msra.mxu0 0.0
    %86 = vmatprep.subr.mxu0 0.0
    %87 = vmatpush2.msra.mxu0 0.0
    %88 = vmatprep.subr.mxu0 0.0
    %89 = vmatpush2.msra.mxu0 0.0
    %90 = vmatprep.subr.mxu0 0.0
    %91 = vmatpush2.msra.mxu0 0.0
    %92 = vmatprep.subr.mxu0 0.0
    %93 = vmatpush2.msra.mxu0 0.0
    %94 = vmatprep.subr.mxu0 0.0
    %95 = vmatpush2.msra.mxu0 0.0
    %96 = vmatprep.subr.mxu0 0.0
    %97 = vmatpush2.msra.mxu0 0.0
    %98 = vmatprep.mubr.f32.mxu0 0.0
    %99 = vmatmul.mubr.f32.gmra.mxu0 %v32
    %v100 = vpop.f32.mrf.mxu0
    %v101 = vadd.f32 0.0, %v100
    %v102 = vpop.f32.mrf.mxu0
    %103 = vdwg.mxu0
    %v104 = vld [vmem:[%s2] sm:$0xff]
    %v105 = vld [vmem:[%s2 + $0x8] sm:$0xff]
    %v106 = vld [vmem:[%s2 + $0x10] sm:$0xff]
    %v107 = vld [vmem:[%s2 + $0x18] sm:$0xff]
    %v108 = vld [vmem:[%s2 + $0x20] sm:$0xff]
    %v109 = vld [vmem:[%s2 + $0x28] sm:$0xff]
    %v110 = vld [vmem:[%s2 + $0x30] sm:$0xff]
    %v111 = vld [vmem:[%s2 + $0x38] sm:$0xff]
    %v112 = vld [vmem:[%s2 + $0x40] sm:$0xff]
    %v113 = vld [vmem:[%s2 + $0x48] sm:$0xff]
    %v114 = vld [vmem:[%s2 + $0x50] sm:$0xff]
    %v115 = vld [vmem:[%s2 + $0x58] sm:$0xff]
    %v116 = vld [vmem:[%s2 + $0x60] sm:$0x1]
    %v117 = vld [vmem:[%s2 + $0x61] sm:$0x1]
    %v118 = vlaneseq
    %v119 = vshrl.u32 %v118, 7
    %v120 = vsub.s32 0, %v119
    %v121 = vrot.slane %v116, %v120
    %vm122 = vcmask 261120
    %v124 = vsel %vm122, %v101, 0
    %126 = vmatprep.subr.mxu0 0.0
    %127 = vmatpush1.msra.mxu0 0.0
    %128 = vmatprep.subr.mxu0 0.0
    %129 = vmatpush1.msra.mxu0 0.0
    %130 = vmatprep.subr.mxu0 0.0
    %131 = vmatpush1.msra.mxu0 0.0
    %132 = vmatprep.subr.mxu0 0.0
    %133 = vmatpush1.msra.mxu0 0.0
    %134 = vmatprep.subr.mxu0 0.0
    %135 = vmatpush1.msra.mxu0 0.0
    %136 = vmatprep.subr.mxu0 0.0
    %137 = vmatpush1.msra.mxu0 0.0
    %138 = vmatprep.subr.mxu0 0.0
    %139 = vmatpush1.msra.mxu0 0.0
    %140 = vmatprep.subr.mxu0 0.0
    %141 = vmatpush1.msra.mxu0 0.0
    %142 = vmatprep.subr.mxu0 0.0
    %143 = vmatpush1.msra.mxu0 0.0
    %144 = vmatprep.subr.mxu0 0.0
    %145 = vmatpush1.msra.mxu0 0.0
    %146 = vmatprep.subr.mxu0 0.0
    %147 = vmatpush1.msra.mxu0 0.0
    %148 = vmatprep.subr.mxu0 0.0
    %149 = vmatpush1.msra.mxu0 0.0
    %150 = vmatprep.subr.mxu0 0.0
    %151 = vmatpush1.msra.mxu0 %v107
    %152 = vmatprep.subr.mxu0 0.0
    %153 = vmatpush1.msra.mxu0 %v106
    %154 = vmatprep.subr.mxu0 0.0
    %155 = vmatpush1.msra.mxu0 %v105
    %156 = vmatprep.subr.mxu0 0.0
    %157 = vmatpush1.msra.mxu0 %v104
    %158 = vmatprep.subr.mxu0 0.0
    %159 = vmatpush2.msra.mxu0 0.0
    %160 = vmatprep.subr.mxu0 0.0
    %161 = vmatpush2.msra.mxu0 0.0
    %162 = vmatprep.subr.mxu0 0.0
    %163 = vmatpush2.msra.mxu0 0.0
    %164 = vmatprep.subr.mxu0 0.0
    %165 = vmatpush2.msra.mxu0 0.0
    %166 = vmatprep.subr.mxu0 0.0
    %167 = vmatpush2.msra.mxu0 0.0
    %168 = vmatprep.subr.mxu0 0.0
    %169 = vmatpush2.msra.mxu0 0.0
    %170 = vmatprep.subr.mxu0 0.0
    %171 = vmatpush2.msra.mxu0 0.0
    %172 = vmatprep.subr.mxu0 0.0
    %173 = vmatpush2.msra.mxu0 0.0
    %174 = vmatprep.subr.mxu0 0.0
    %175 = vmatpush2.msra.mxu0 0.0
    %176 = vmatprep.subr.mxu0 0.0
    %177 = vmatpush2.msra.mxu0 0.0
    %178 = vmatprep.subr.mxu0 0.0
    %179 = vmatpush2.msra.mxu0 0.0
    %180 = vmatprep.subr.mxu0 0.0
    %181 = vmatpush2.msra.mxu0 0.0
    %182 = vmatprep.subr.mxu0 0.0
    %183 = vmatpush2.msra.mxu0 0.0
    %184 = vmatprep.subr.mxu0 0.0
    %185 = vmatpush2.msra.mxu0 0.0
    %186 = vmatprep.subr.mxu0 0.0
    %187 = vmatpush2.msra.mxu0 0.0
    %188 = vmatprep.subr.mxu0 0.0
    %189 = vmatpush2.msra.mxu0 0.0
    %190 = vmatprep.mubr.f32.mxu0 0.0
    %191 = vmatmul.mubr.f32.gmra.mxu0 %v124
    %v192 = vpop.f32.mrf.mxu0
    %v193 = vadd.f32 %v121, %v192
    %v194 = vpop.f32.mrf.mxu0
    %195 = vdwg.mxu0
    %v196 = vmul.f32 %v193, 0.5
    %v197 = vmul.f32 %v193, 0.70710677
    %v198 = verf.f32.pop %v197
    %v199 = vadd.f32 %v198, 1.0
    %v200 = vmul.f32 %v196, %v199
    %v201 = vlaneseq
    %v202 = vshrl.u32 %v201, 7
    %v203 = vsub.s32 0, %v202
    %v204 = vrot.slane %v117, %v203
    %vm205 = vcmask 523264
    %v207 = vsel %vm205, %v200, 0
    %209 = vmatprep.subr.mxu0 0.0
    %210 = vmatpush1.msra.mxu0 0.0
    %211 = vmatprep.subr.mxu0 0.0
    %212 = vmatpush1.msra.mxu0 0.0
    %213 = vmatprep.subr.mxu0 0.0
    %214 = vmatpush1.msra.mxu0 0.0
    %215 = vmatprep.subr.mxu0 0.0
    %216 = vmatpush1.msra.mxu0 0.0
    %217 = vmatprep.subr.mxu0 0.0
    %218 = vmatpush1.msra.mxu0 0.0
    %219 = vmatprep.subr.mxu0 0.0
    %220 = vmatpush1.msra.mxu0 0.0
    %221 = vmatprep.subr.mxu0 0.0
    %222 = vmatpush1.msra.mxu0 0.0
    %223 = vmatprep.subr.mxu0 0.0
    %224 = vmatpush1.msra.mxu0 0.0
    %225 = vmatprep.subr.mxu0 0.0
    %226 = vmatpush1.msra.mxu0 %v115
    %227 = vmatprep.subr.mxu0 0.0
    %228 = vmatpush1.msra.mxu0 %v114
    %229 = vmatprep.subr.mxu0 0.0
    %230 = vmatpush1.msra.mxu0 %v113
    %231 = vmatprep.subr.mxu0 0.0
    %232 = vmatpush1.msra.mxu0 %v112
    %233 = vmatprep.subr.mxu0 0.0
    %234 = vmatpush1.msra.mxu0 %v111
    %235 = vmatprep.subr.mxu0 0.0
    %236 = vmatpush1.msra.mxu0 %v110
    %237 = vmatprep.subr.mxu0 0.0
    %238 = vmatpush1.msra.mxu0 %v109
    %239 = vmatprep.subr.mxu0 0.0
    %240 = vmatpush1.msra.mxu0 %v108
    %241 = vmatprep.subr.mxu0 0.0
    %242 = vmatpush2.msra.mxu0 0.0
    %243 = vmatprep.subr.mxu0 0.0
    %244 = vmatpush2.msra.mxu0 0.0
    %245 = vmatprep.subr.mxu0 0.0
    %246 = vmatpush2.msra.mxu0 0.0
    %247 = vmatprep.subr.mxu0 0.0
    %248 = vmatpush2.msra.mxu0 0.0
    %249 = vmatprep.subr.mxu0 0.0
    %250 = vmatpush2.msra.mxu0 0.0
    %251 = vmatprep.subr.mxu0 0.0
    %252 = vmatpush2.msra.mxu0 0.0
    %253 = vmatprep.subr.mxu0 0.0
    %254 = vmatpush2.msra.mxu0 0.0
    %255 = vmatprep.subr.mxu0 0.0
    %256 = vmatpush2.msra.mxu0 0.0
    %257 = vmatprep.subr.mxu0 0.0
    %258 = vmatpush2.msra.mxu0 0.0
    %259 = vmatprep.subr.mxu0 0.0
    %260 = vmatpush2.msra.mxu0 0.0
    %261 = vmatprep.subr.mxu0 0.0
    %262 = vmatpush2.msra.mxu0 0.0
    %263 = vmatprep.subr.mxu0 0.0
    %264 = vmatpush2.msra.mxu0 0.0
    %265 = vmatprep.subr.mxu0 0.0
    %266 = vmatpush2.msra.mxu0 0.0
    %267 = vmatprep.subr.mxu0 0.0
    %268 = vmatpush2.msra.mxu0 0.0
    %269 = vmatprep.subr.mxu0 0.0
    %270 = vmatpush2.msra.mxu0 0.0
    %271 = vmatprep.subr.mxu0 0.0
    %272 = vmatpush2.msra.mxu0 0.0
    %273 = vmatprep.mubr.f32.mxu0 0.0
    %274 = vmatmul.mubr.f32.gmra.mxu0 %v207
    %v275 = vpop.f32.mrf.mxu0
    %v276 = vadd.f32 %v204, %v275
    %v277 = vpop.f32.mrf.mxu0
    %278 = vdwg.mxu0
    %279 = vst.msk [vmem:[#allocation2] sm:$0xff] %vm205, %v276
    // Predicated region
    $region14: #{tpu_custom_call.1} parent=1 // pred_check
      _
    $region15: #{tpu_custom_call.1} parent=1 // pred_check_branch
      %281 = sbr.rel (0) target = $region17
    $region16: #{tpu_custom_call.1} parent=1 // pred_region
      %s283 = ssub.s32 128, 128
      %284 = vsyncadd [#allocation3], %s283
      %s286 = sshll.u32 [#allocation2], 4
      %s287 = int_to_ptr.vmem [resolvable:$true] %s286
      %289 = dma.vmem_to_hbm [thread:$0]  %s287, 128, %s3, [#allocation3]
    $region17: #{tpu_custom_call.1} parent=1 // pred_fallthru
      _
    // Predicated region
    $region18: #{tpu_custom_call.1} parent=1 // pred_check
      _
    $region19: #{tpu_custom_call.1} parent=1 // pred_check_branch
      %291 = sbr.rel (0) target = $region21
    $region20: #{tpu_custom_call.1} parent=1 // pred_region
      %292 = dma.done [#allocation3], 128
    $region21: #{tpu_custom_call.1} parent=1 // pred_fallthru
      _
    %293 = vsyncpa [#allocation3], 1

</llo_original>
